<compile_context>
chip_gen: v5e
topology: v5e:2x2
jax: 0.10.0
libtpu: 0.0.40
codegen_flags: <defaults>
</compile_context>

<pallas_src>
import jax
import jax.numpy as jnp
import numpy as np
from jax.experimental import pallas as pl
from jax.experimental.pallas import tpu as pltpu

EPS = 1e-6


# ---------------------------------------------------------------------------
# Phase 1 kernel:  y = silu(emb) @ W + b      (B, D) x (D, 9D) -> (B, 9D)
# ---------------------------------------------------------------------------
def _silu_linear_kernel(e_ref, w_ref, b_ref, y_ref):
    # SiLU in f32 (exact), then cast to the streamed weight dtype (bf16) so the
    # MXU runs its native bf16 path on every generation; accumulation is f32.
    e = e_ref[...]                                   # (B, D), resident across grid
    e = (e * jax.nn.sigmoid(e)).astype(w_ref.dtype)  # VPU + EUP, tiny
    y_ref[...] = (
        jnp.dot(e, w_ref[...], preferred_element_type=jnp.float32)  # MXU
        + b_ref[...]                                 # bias kept f32 (negligible bytes)
    )


# ---------------------------------------------------------------------------
# Phase 2 kernel: LayerNorm + the two modulated outputs, tiled over (B, S)
# ---------------------------------------------------------------------------
def _ln_modulate_kernel(mod_ref, h_ref, hs_ref, norm2_ref):
    D = h_ref.shape[-1]
    mod = mod_ref[...]                               # (1, 4D) f32, resident per batch

    # Hoisted broadcasts (computed once per grid step).
    shift_msa  = mod[:, 0 * D:1 * D][:, None, :]             # (1, 1, D)
    scale_msa  = (1.0 + mod[:, 1 * D:2 * D])[:, None, :]
    shift_msa2 = mod[:, 2 * D:3 * D][:, None, :]
    scale_msa2 = (1.0 + mod[:, 3 * D:4 * D])[:, None, :]

    # LayerNorm: no affine, eps=1e-6, biased variance (matches torch); math in f32.
    h = h_ref[...].astype(jnp.float32)               # (1, TS, D)
    mean = jnp.mean(h, axis=-1, keepdims=True)
    var = jnp.mean((h - mean) ** 2, axis=-1, keepdims=True)
    norm = (h - mean) * jax.lax.rsqrt(var + EPS)

    # Both modulations reuse the same vreg-resident `norm`; cast only at the store.
    hs_ref[...]    = (norm * scale_msa + shift_msa).astype(hs_ref.dtype)
    norm2_ref[...] = (norm * scale_msa2 + shift_msa2).astype(norm2_ref.dtype)


# ---------------------------------------------------------------------------
# Tiling / VMEM helpers
# ---------------------------------------------------------------------------
def _vmem_capacity_bytes():
    try:
        return int(pltpu.get_tpu_info().vmem_capacity_bytes)
    except Exception:
        return 64 * 1024 * 1024          # conservative default (v7x per-TC size)


def _vmem_limit(est_bytes, cap_bytes):
    hi = max(cap_bytes - (8 << 20), 16 << 20)
    return int(min(max(est_bytes, 32 << 20), hi))


def _phase1_tiling(B, D, cap_bytes):
    """Column tile (tn, n_col) for streaming the (D, 9D) bf16 weight.

    Prefers an even tile count (v7x 2-TC load balance), then the largest tile
    that fits a ~40% VMEM budget.  Never returns a block larger than the budget.
    """
    NC = 9 * D
    budget = int(cap_bytes * 0.40)
    # Dominant VMEM user per column: double-buffered bf16 weight (+ f32 bias/out).
    bytes_per_col = 2 * (2 * D + 4 + 4 * B)
    max_tn = max(1, budget // max(bytes_per_col, 1))

    if NC <= 128 or (NC % 128 != 0 and NC <= max_tn):
        return NC, 1                                  # tiny / unaligned-but-fits

    max_tn_aligned = max(128, (min(max_tn, NC) // 128) * 128)
    cands = [t for t in range(128, max_tn_aligned + 1, 128) if NC % t == 0]
    if cands:
        # Even tile count first (megacore balance), then bigger tiles.
        cands.sort(key=lambda t: ((NC // t) % 2, -t))
        tn = cands[0]
        return tn, NC // tn
    # No aligned divisor fits the budget: fixed aligned tile, trailing block masked.
    return max_tn_aligned, pl.cdiv(NC, max_tn_aligned)


def _phase2_seq_tile(S, D, out_itemsize, cap_bytes):
    """Sequence tile (ts, n_seq) for the LN/modulation phase."""
    # Larger budget fraction on 128 MiB-VMEM chips (v5e/v6e), tighter on v7x.
    frac = 0.6 if cap_bytes >= (96 << 20) else 0.45
    budget = int(cap_bytes * frac)
    bytes_per_row = 2 * D * (4 + 2 * out_itemsize)    # dbl-buf: f32 in + 2 outs
    max_ts = max(8, budget // max(bytes_per_row, 1))
    if S <= max_ts:
        return S, 1
    ts = (max_ts // 8) * 8
    # Prefer an exact divisor close to the cap (no masked trailing block) ...
    for t in range(ts, max(ts // 2, 8) - 1, -8):
        if S % t == 0:
            return t, S // t
    # ... otherwise keep the big aligned tile; trailing block is masked.
    return ts, pl.cdiv(S, ts)


# ---------------------------------------------------------------------------
# Wrapper
# ---------------------------------------------------------------------------
def sd3_adaln_zero(hidden_states, emb, w, b):
    """hidden_states: (B, S, D); emb: (B, D); w: (D, 9D); b: (1, 9D)."""
    B, S, D = hidden_states.shape
    NC = 9 * D
    assert emb.shape == (B, D)
    assert w.shape == (D, NC)
    assert b.shape == (1, NC)

    cap = _vmem_capacity_bytes()
    out_dtype = hidden_states.dtype
    out_size = jnp.dtype(out_dtype).itemsize

    # Perf: stream the phase-1 weight in bf16 (halves the dominant HBM traffic).
    w_lp = w.astype(jnp.bfloat16)
    b_f32 = b.astype(jnp.float32)
    emb_f32 = emb.astype(jnp.float32)

    # ---------------- Phase 1: modulation vectors (batched matmul) ----------
    tn, n_col = _phase1_tiling(B, D, cap)
    est1 = 2 * (D * tn * 2 + tn * 4 + B * tn * 4 + B * D * 4) + (4 << 20)

    y = pl.pallas_call(
        _silu_linear_kernel,
        out_shape=jax.ShapeDtypeStruct((B, NC), jnp.float32),
        grid_spec=pltpu.PrefetchScalarGridSpec(
            num_scalar_prefetch=0,
            grid=(n_col,),
            in_specs=[
                pl.BlockSpec((B, D), lambda j: (0, 0)),        # emb (resident)
                pl.BlockSpec((D, tn), lambda j: (0, j)),       # bf16 W column tile
                pl.BlockSpec((1, tn), lambda j: (0, j)),       # f32 bias column tile
            ],
            out_specs=pl.BlockSpec((B, tn), lambda j: (0, j)),
        ),
        compiler_params=pltpu.CompilerParams(
            dimension_semantics=("parallel",),
            vmem_limit_bytes=_vmem_limit(est1, cap)),
    )(emb_f32, w_lp, b_f32)

    # Phase 2 only needs 4 of the 9 chunks: pack them as a compact (B, 4D) slab.
    mod = jnp.concatenate([y[:, 0:2 * D], y[:, 6 * D:8 * D]], axis=-1)

    # ---------------- Phase 2: LayerNorm + modulation over (B, S) -----------
    ts, n_seq = _phase2_seq_tile(S, D, out_size, cap)
    seq_spec = pl.BlockSpec((1, ts, D), lambda bi, si: (bi, si, 0))
    est2 = 2 * (ts * D * 4 + 2 * ts * D * out_size + 4 * D * 4) + (4 << 20)

    hs, norm2 = pl.pallas_call(
        _ln_modulate_kernel,
        out_shape=(jax.ShapeDtypeStruct((B, S, D), out_dtype),
                   jax.ShapeDtypeStruct((B, S, D), out_dtype)),
        grid_spec=pltpu.PrefetchScalarGridSpec(
            num_scalar_prefetch=0,
            grid=(B, n_seq),
            in_specs=[
                pl.BlockSpec((1, 4 * D), lambda bi, si: (bi, 0)),  # mod slab (resident)
                seq_spec,                                          # hidden tile
            ],
            out_specs=[seq_spec, seq_spec],
        ),
        compiler_params=pltpu.CompilerParams(
            dimension_semantics=("parallel", "parallel"),
            vmem_limit_bytes=_vmem_limit(est2, cap)),
    )(mod, hidden_states)

    # ---------------- Pass-through chunks: sliced once in the wrapper -------
    gate_msa  = y[:, 2 * D:3 * D]
    shift_mlp = y[:, 3 * D:4 * D]
    scale_mlp = y[:, 4 * D:5 * D]
    gate_mlp  = y[:, 5 * D:6 * D]
    gate_msa2 = y[:, 8 * D:9 * D]

    return hs, gate_msa, shift_mlp, scale_mlp, gate_mlp, norm2, gate_msa2


# ---------------------------------------------------------------------------
# Pure-JAX f32 reference (matches the PyTorch module semantics)
# ---------------------------------------------------------------------------
def _reference(hidden_states, emb, w, b):
    e = emb * jax.nn.sigmoid(emb)
    y = e @ w + b
    D = emb.shape[1]
    chunks = [y[:, i * D:(i + 1) * D] for i in range(9)]
    (shift_msa, scale_msa, gate_msa, shift_mlp, scale_mlp,
     gate_mlp, shift_msa2, scale_msa2, gate_msa2) = chunks
    mean = jnp.mean(hidden_states, axis=-1, keepdims=True)
    var = jnp.mean((hidden_states - mean) ** 2, axis=-1, keepdims=True)
    norm = (hidden_states - mean) * jax.lax.rsqrt(var + EPS)
    hs = norm * (1.0 + scale_msa[:, None]) + shift_msa[:, None]
    norm2 = norm * (1.0 + scale_msa2[:, None]) + shift_msa2[:, None]
    return hs, gate_msa, shift_mlp, scale_mlp, gate_mlp, norm2, gate_msa2


if __name__ == "__main__":
    B, S, D = 2, 8, 128   # small, lane-aligned demo shapes

    key = jax.random.PRNGKey(0)
    k_h, k_e, k_w, k_b = jax.random.split(key, 4)

    hidden_states = jax.random.normal(k_h, (B, S, D), dtype=jnp.float32)
    emb = jax.random.normal(k_e, (B, D), dtype=jnp.float32)

    # Deterministic nn.Linear-style init: uniform(-1/sqrt(D), 1/sqrt(D)).
    bound = 1.0 / np.sqrt(D)
    w = jax.random.uniform(k_w, (D, 9 * D), jnp.float32, -bound, bound)
    b = jax.random.uniform(k_b, (1, 9 * D), jnp.float32, -bound, bound)

    outs = sd3_adaln_zero(hidden_states, emb, w, b)
    outs = jax.block_until_ready(outs)

    # Tolerance relaxed vs. the f32 reference because the linear weights are
    # deliberately streamed in bf16 (reviewed precision/perf trade-off).
    refs = _reference(hidden_states, emb, w, b)
    for o, r in zip(outs, refs):
        np.testing.assert_allclose(np.asarray(o, dtype=np.float32),
                                   np.asarray(r), rtol=2e-2, atol=2.5e-2)

    print("KERNEL_OK")
</pallas_src>

<mosaic_0001>
module attributes {stable_mosaic.version = 11 : i64} {
  func.func @_silu_linear_kernel(%arg0: i32, %arg1: memref<2x128xf32, #tpu.memory_space<vmem>>, %arg2: memref<128x1152xbf16, #tpu.memory_space<vmem>>, %arg3: memref<1x1152xf32, #tpu.memory_space<vmem>>, %arg4: memref<2x1152xf32, #tpu.memory_space<vmem>>) attributes {dimension_semantics = [#tpu.dimension_semantics<parallel>], iteration_bounds = array<i64: 1>, scalar_prefetch = 0 : i64, scratch_operands = 0 : i64, tpu.core_type = #tpu.core_type<tc>, window_params = [{pipeline_mode = #tpu.pipeline_mode<synchronous>, transform_indices = @transform_0, window_bounds = array<i64: 2, 128>}, {transform_indices = @transform_1, window_bounds = array<i64: 128, 1152>}, {transform_indices = @transform_2, window_bounds = array<i64: 1, 1152>}, {transform_indices = @transform_3, window_bounds = array<i64: 2, 1152>}]} {
    %c0 = arith.constant 0 : index
    %c0_0 = arith.constant 0 : index
    %0 = vector.load %arg1[%c0, %c0_0] : memref<2x128xf32, #tpu.memory_space<vmem>>, vector<2x128xf32>
    %1 = arith.negf %0 : vector<2x128xf32>
    %2 = math.exp %1 : vector<2x128xf32>
    %cst = arith.constant 1.000000e+00 : f32
    %3 = vector.broadcast %cst : f32 to vector<2x128xf32>
    %4 = arith.addf %3, %2 : vector<2x128xf32>
    %5 = arith.divf %3, %4 : vector<2x128xf32>
    %6 = arith.mulf %0, %5 : vector<2x128xf32>
    %7 = arith.truncf %6 : vector<2x128xf32> to vector<2x128xbf16>
    %c0_1 = arith.constant 0 : index
    %c0_2 = arith.constant 0 : index
    %8 = vector.load %arg2[%c0_1, %c0_2] : memref<128x1152xbf16, #tpu.memory_space<vmem>>, vector<128x1152xbf16>
    %cst_3 = arith.constant dense<0.000000e+00> : vector<2x1152xf32>
    %9 = tpu.matmul %7, %8, %cst_3 {dimension_numbers = #tpu.dot_dimension_numbers<[1], [0], [0], [1], [0, 0, 1, 1], [], []>} : vector<2x128xbf16>, vector<128x1152xbf16>, vector<2x1152xf32> -> vector<2x1152xf32>
    %c0_4 = arith.constant 0 : index
    %c0_5 = arith.constant 0 : index
    %10 = vector.load %arg3[%c0_4, %c0_5] : memref<1x1152xf32, #tpu.memory_space<vmem>>, vector<1x1152xf32>
    %11 = vector.broadcast %10 : vector<1x1152xf32> to vector<2x1152xf32>
    %12 = arith.addf %9, %11 : vector<2x1152xf32>
    %c0_6 = arith.constant 0 : index
    %c0_7 = arith.constant 0 : index
    %13 = vector.load %arg4[%c0_6, %c0_7] : memref<2x1152xf32, #tpu.memory_space<vmem>>, vector<2x1152xf32>
    tpu.vector_store %arg4[%c0_6, %c0_7], %12 {strides = array<i32>} : memref<2x1152xf32, #tpu.memory_space<vmem>>, vector<2x1152xf32>,
    return
  }
  func.func @transform_0(%arg0: i32) -> (i32, i32) {
    %c0_i32 = arith.constant 0 : i32
    %c0_i32_0 = arith.constant 0 : i32
    %c0_i32_1 = arith.constant 0 : i32
    return %c0_i32, %c0_i32_0 : i32, i32
  }
  func.func @transform_1(%arg0: i32) -> (i32, i32) {
    %c0_i32 = arith.constant 0 : i32
    %c0_i32_0 = arith.constant 0 : i32
    return %c0_i32, %arg0 : i32, i32
  }
  func.func @transform_2(%arg0: i32) -> (i32, i32) {
    %c0_i32 = arith.constant 0 : i32
    %c0_i32_0 = arith.constant 0 : i32
    return %c0_i32, %arg0 : i32, i32
  }
  func.func @transform_3(%arg0: i32) -> (i32, i32) {
    %c0_i32 = arith.constant 0 : i32
    %c0_i32_0 = arith.constant 0 : i32
    return %c0_i32, %arg0 : i32, i32
  }
}

</mosaic_0001>

<llo_original>
// kernel: tpu_custom_call.1
$region0: #{tpu_custom_call.1}
  #allocation0 [shape = 'u32[]', space=smem, size = 0x4, offset = 0x4, fixed_abs, tag = 'smem constant byte address 0x4 - core index']
  #allocation1 [shape = 'u32[72,128]{1,0:T(1,128)}', space=vmem, size = 0x9000, scoped, tag = 'internal scratch']
  %s0 = inlined_call_operand.hbm [shape: f32[2,128], index: 0, kind: input, shape index: {}]
  %s1 = inlined_call_operand.hbm [shape: bf16[128,1152], index: 1, kind: input, shape index: {}]
  %s2 = inlined_call_operand.hbm [shape: f32[1,1152], index: 2, kind: input, shape index: {}]
  %s3 = inlined_call_operand.hbm [shape: f32[2,1152], index: 3, kind: output, shape index: {}]
  %s4 = sld [smem:[#allocation0]]
  $region34: #{tpu_custom_call.1} parent=0
    _
  %s6 = ssub.s32 1, %s4
  %s7 = scalar_select 0, %s6, %s4
  $region1: #{tpu_custom_call.1} parent=0
    #allocation2 [shape = 'u8[1024]{0}', space=vmem, size = 0x400, scoped, tag = 'input window, operand 0, single buffered']
    #allocation3 [shape = 's32[1]{0}', space=sflag, size = 0x4, scoped, tag = 'scoped memory for tpu_custom_call.1']
    #allocation4 [shape = 's32[1]{0}', space=sflag, size = 0x4, scoped, tag = 'scoped memory for tpu_custom_call.1']
    #allocation5 [shape = 'u8[294912]{0}', space=vmem, size = 0x48000, scoped, tag = 'input window, operand 1, single buffered']
    #allocation6 [shape = 's32[1]{0}', space=sflag, size = 0x4, scoped, tag = 'scoped memory for tpu_custom_call.1']
    #allocation7 [shape = 'u8[4608]{0}', space=vmem, size = 0x1400, scoped, tag = 'input window, operand 2, single buffered']
    #allocation8 [shape = 'u8[9216]{0}', space=vmem, size = 0x2400, scoped, tag = 'output window, operand 0, single buffered']
    %8 = vsyncpa [#allocation3], 0
    %9 = vsyncpa [#allocation6], 0
    %10 = vsyncpa [#allocation4], 0
    // Predicated region
    $region2: #{tpu_custom_call.1} parent=1 // pred_check
      _
    $region3: #{tpu_custom_call.1} parent=1 // pred_check_branch
      %12 = sbr.rel (0) target = $region5
    $region4: #{tpu_custom_call.1} parent=1 // pred_region
      %14 = vsyncadd [#allocation3], 0
      %s16 = sshll.u32 %s0, 4
      %s17 = int_to_ptr.hbm [resolvable:$true] %s16
      %s18 = sshll.u32 [#allocation2], 4
      %s19 = int_to_ptr.vmem [resolvable:$true] %s18
      %21 = dma.hbm_to_vmem [thread:$0]  %s17, 32, %s19, [#allocation3]
    $region5: #{tpu_custom_call.1} parent=1 // pred_fallthru
      _
    // Predicated region
    $region6: #{tpu_custom_call.1} parent=1 // pred_check
      _
    $region7: #{tpu_custom_call.1} parent=1 // pred_check_branch
      %23 = sbr.rel (0) target = $region9
    $region8: #{tpu_custom_call.1} parent=1 // pred_region
      %25 = vsyncadd [#allocation6], 0
      %s26 = sshll.u32 %s1, 4
      %s27 = int_to_ptr.hbm [resolvable:$true] %s26
      %s28 = sshll.u32 [#allocation5], 4
      %s29 = int_to_ptr.vmem [resolvable:$true] %s28
      %34 = dma.hbm_to_vmem [thread:$0]  %s27, 9216, %s29, [#allocation6], 576, 576, 36
    $region9: #{tpu_custom_call.1} parent=1 // pred_fallthru
      _
    // Predicated region
    $region10: #{tpu_custom_call.1} parent=1 // pred_check
      _
    $region11: #{tpu_custom_call.1} parent=1 // pred_check_branch
      %36 = sbr.rel (0) target = $region13
    $region12: #{tpu_custom_call.1} parent=1 // pred_region
      %38 = vsyncadd [#allocation6], 0
      %s40 = sshll.u32 %s2, 4
      %s41 = int_to_ptr.hbm [resolvable:$true] %s40
      %s42 = sshll.u32 [#allocation7], 4
      %s43 = int_to_ptr.vmem [resolvable:$true] %s42
      %45 = dma.hbm_to_vmem [thread:$0]  %s41, 144, %s43, [#allocation6]
    $region13: #{tpu_custom_call.1} parent=1 // pred_fallthru
      _
    // Predicated region
    $region14: #{tpu_custom_call.1} parent=1 // pred_check
      _
    $region15: #{tpu_custom_call.1} parent=1 // pred_check_branch
      %47 = sbr.rel (0) target = $region17
    $region16: #{tpu_custom_call.1} parent=1 // pred_region
      %49 = dma.done [#allocation3], 32
    $region17: #{tpu_custom_call.1} parent=1 // pred_fallthru
      _
    // Predicated region
    $region18: #{tpu_custom_call.1} parent=1 // pred_check
      _
    $region19: #{tpu_custom_call.1} parent=1 // pred_check_branch
      %51 = sbr.rel (0) target = $region21
    $region20: #{tpu_custom_call.1} parent=1 // pred_region
      %53 = dma.done [#allocation6], 9216
    $region21: #{tpu_custom_call.1} parent=1 // pred_fallthru
      _
    // Predicated region
    $region22: #{tpu_custom_call.1} parent=1 // pred_check
      _
    $region23: #{tpu_custom_call.1} parent=1 // pred_check_branch
      %55 = sbr.rel (0) target = $region25
    $region24: #{tpu_custom_call.1} parent=1 // pred_region
      %57 = dma.done [#allocation6], 144
    $region25: #{tpu_custom_call.1} parent=1 // pred_fallthru
      _
    %v58 = vld [vmem:[#allocation2] sm:$0x3]
    %v59 = vxor.u32 %v58, 2147483648
    %v60 = vmul.f32 %v59, 1.442695
    %v61 = vpow.pop %v60
    %v62 = vadd.f32 %v61, 1.0
    %v63 = vrcp.pop %v62
    %v64 = vmul.f32 %v62, %v63
    %v65 = vsub.f32 1.0, %v64
    %v66 = vmul.f32 %v63, %v65
    %v67 = vadd.f32 %v63, %v66
    %vm68 = vweird.f32 %v62
    %vm69 = vweird.f32 %v63
    %vm70 = vmor %vm68, %vm69
    %v71 = vsel %vm70, %v63, %v67
    %v72 = vand.u32 2147483647, %v62
    %vm73 = vcmp.eq.f32.partialorder %v72, 8.507059e+37
    %v74 = vand.u32 %v62, 2147483648
    %v75 = vor.u32 1.1754944e-38, %v74
    %v76 = vsel %vm73, %v75, %v71
    %v77 = vmul.f32 1.0, %v76
    %v78 = vmul.f32 %v58, %v77
    %v79 = vpack.c.bf16 %v78, %v78
    %v80 = vld [vmem:[#allocation5] sm:$0xff]
    %v81 = vld [vmem:[#allocation5 + $0x8] sm:$0xff]
    %v82 = vld [vmem:[#allocation5 + $0x10] sm:$0xff]
    %v83 = vld [vmem:[#allocation5 + $0x18] sm:$0xff]
    %v84 = vld [vmem:[#allocation5 + $0x20] sm:$0xf]
    %v85 = vld [vmem:[#allocation5 + $0x24] sm:$0xff]
    %v86 = vld [vmem:[#allocation5 + $0x2c] sm:$0xff]
    %v87 = vld [vmem:[#allocation5 + $0x34] sm:$0xff]
    %v88 = vld [vmem:[#allocation5 + $0x3c] sm:$0xff]
    %v89 = vld [vmem:[#allocation5 + $0x44] sm:$0xf]
    %v90 = vld [vmem:[#allocation5 + $0x48] sm:$0xff]
    %v91 = vld [vmem:[#allocation5 + $0x50] sm:$0xff]
    %v92 = vld [vmem:[#allocation5 + $0x58] sm:$0xff]
    %v93 = vld [vmem:[#allocation5 + $0x60] sm:$0xff]
    %v94 = vld [vmem:[#allocation5 + $0x68] sm:$0xf]
    %v95 = vld [vmem:[#allocation5 + $0x6c] sm:$0xff]
    %v96 = vld [vmem:[#allocation5 + $0x74] sm:$0xff]
    %v97 = vld [vmem:[#allocation5 + $0x7c] sm:$0xff]
    %v98 = vld [vmem:[#allocation5 + $0x84] sm:$0xff]
    %v99 = vld [vmem:[#allocation5 + $0x8c] sm:$0xf]
    %v100 = vld [vmem:[#allocation5 + $0x90] sm:$0xff]
    %v101 = vld [vmem:[#allocation5 + $0x98] sm:$0xff]
    %v102 = vld [vmem:[#allocation5 + $0xa0] sm:$0xff]
    %v103 = vld [vmem:[#allocation5 + $0xa8] sm:$0xff]
    %v104 = vld [vmem:[#allocation5 + $0xb0] sm:$0xf]
    %v105 = vld [vmem:[#allocation5 + $0xb4] sm:$0xff]
    %v106 = vld [vmem:[#allocation5 + $0xbc] sm:$0xff]
    %v107 = vld [vmem:[#allocation5 + $0xc4] sm:$0xff]
    %v108 = vld [vmem:[#allocation5 + $0xcc] sm:$0xff]
    %v109 = vld [vmem:[#allocation5 + $0xd4] sm:$0xf]
    %v110 = vld [vmem:[#allocation5 + $0xd8] sm:$0xff]
    %v111 = vld [vmem:[#allocation5 + $0xe0] sm:$0xff]
    %v112 = vld [vmem:[#allocation5 + $0xe8] sm:$0xff]
    %v113 = vld [vmem:[#allocation5 + $0xf0] sm:$0xff]
    %v114 = vld [vmem:[#allocation5 + $0xf8] sm:$0xf]
    %v115 = vld [vmem:[#allocation5 + $0xfc] sm:$0xff]
    %v116 = vld [vmem:[#allocation5 + $0x104] sm:$0xff]
    %v117 = vld [vmem:[#allocation5 + $0x10c] sm:$0xff]
    %v118 = vld [vmem:[#allocation5 + $0x114] sm:$0xff]
    %v119 = vld [vmem:[#allocation5 + $0x11c] sm:$0xf]
    %v120 = vld [vmem:[#allocation5 + $0x120] sm:$0xff]
    %v121 = vld [vmem:[#allocation5 + $0x128] sm:$0xff]
    %v122 = vld [vmem:[#allocation5 + $0x130] sm:$0xff]
    %v123 = vld [vmem:[#allocation5 + $0x138] sm:$0xff]
    %v124 = vld [vmem:[#allocation5 + $0x140] sm:$0xf]
    %v125 = vld [vmem:[#allocation5 + $0x144] sm:$0xff]
    %v126 = vld [vmem:[#allocation5 + $0x14c] sm:$0xff]
    %v127 = vld [vmem:[#allocation5 + $0x154] sm:$0xff]
    %v128 = vld [vmem:[#allocation5 + $0x15c] sm:$0xff]
    %v129 = vld [vmem:[#allocation5 + $0x164] sm:$0xf]
    %v130 = vld [vmem:[#allocation5 + $0x168] sm:$0xff]
    %v131 = vld [vmem:[#allocation5 + $0x170] sm:$0xff]
    %v132 = vld [vmem:[#allocation5 + $0x178] sm:$0xff]
    %v133 = vld [vmem:[#allocation5 + $0x180] sm:$0xff]
    %v134 = vld [vmem:[#allocation5 + $0x188] sm:$0xf]
    %v135 = vld [vmem:[#allocation5 + $0x18c] sm:$0xff]
    %v136 = vld [vmem:[#allocation5 + $0x194] sm:$0xff]
    %v137 = vld [vmem:[#allocation5 + $0x19c] sm:$0xff]
    %v138 = vld [vmem:[#allocation5 + $0x1a4] sm:$0xff]
    %v139 = vld [vmem:[#allocation5 + $0x1ac] sm:$0xf]
    %v140 = vld [vmem:[#allocation5 + $0x1b0] sm:$0xff]
    %v141 = vld [vmem:[#allocation5 + $0x1b8] sm:$0xff]
    %v142 = vld [vmem:[#allocation5 + $0x1c0] sm:$0xff]
    %v143 = vld [vmem:[#allocation5 + $0x1c8] sm:$0xff]
    %v144 = vld [vmem:[#allocation5 + $0x1d0] sm:$0xf]
    %v145 = vld [vmem:[#allocation5 + $0x1d4] sm:$0xff]
    %v146 = vld [vmem:[#allocation5 + $0x1dc] sm:$0xff]
    %v147 = vld [vmem:[#allocation5 + $0x1e4] sm:$0xff]
    %v148 = vld [vmem:[#allocation5 + $0x1ec] sm:$0xff]
    %v149 = vld [vmem:[#allocation5 + $0x1f4] sm:$0xf]
    %v150 = vld [vmem:[#allocation5 + $0x1f8] sm:$0xff]
    %v151 = vld [vmem:[#allocation5 + $0x200] sm:$0xff]
    %v152 = vld [vmem:[#allocation5 + $0x208] sm:$0xff]
    %v153 = vld [vmem:[#allocation5 + $0x210] sm:$0xff]
    %v154 = vld [vmem:[#allocation5 + $0x218] sm:$0xf]
    %v155 = vld [vmem:[#allocation5 + $0x21c] sm:$0xff]
    %v156 = vld [vmem:[#allocation5 + $0x224] sm:$0xff]
    %v157 = vld [vmem:[#allocation5 + $0x22c] sm:$0xff]
    %v158 = vld [vmem:[#allocation5 + $0x234] sm:$0xff]
    %v159 = vld [vmem:[#allocation5 + $0x23c] sm:$0xf]
    %v160 = vld [vmem:[#allocation7] sm:$0xff]
    %v161 = vld [vmem:[#allocation7 + $0x8] sm:$0x1]
    %v164 = vperm.slane %v160, 0
    %v165 = vperm.slane %v160, 1
    %v166 = vperm.slane %v160, 2
    %v167 = vperm.slane %v160, 3
    %v168 = vperm.slane %v160, 4
    %v169 = vperm.slane %v160, 5
    %v170 = vperm.slane %v160, 6
    %v171 = vperm.slane %v160, 7
    %v172 = vperm.slane %v161, 0
    %v262 = vunpack.c.l.b16 %v80
    %v263 = vunpack.c.h.b16 %v80
    %v264 = vunpack.c.l.b16 %v81
    %v265 = vunpack.c.h.b16 %v81
    %v266 = vunpack.c.l.b16 %v82
    %v267 = vunpack.c.h.b16 %v82
    %v268 = vunpack.c.l.b16 %v83
    %v269 = vunpack.c.h.b16 %v83
    %v270 = vunpack.c.l.b16 %v84
    %v271 = vunpack.c.l.b16 %v85
    %v272 = vunpack.c.h.b16 %v85
    %v273 = vunpack.c.l.b16 %v86
    %v274 = vunpack.c.h.b16 %v86
    %v275 = vunpack.c.l.b16 %v87
    %v276 = vunpack.c.h.b16 %v87
    %v277 = vunpack.c.l.b16 %v88
    %v278 = vunpack.c.h.b16 %v88
    %v279 = vunpack.c.l.b16 %v89
    %v280 = vunpack.c.l.b16 %v90
    %v281 = vunpack.c.h.b16 %v90
    %v282 = vunpack.c.l.b16 %v91
    %v283 = vunpack.c.h.b16 %v91
    %v284 = vunpack.c.l.b16 %v92
    %v285 = vunpack.c.h.b16 %v92
    %v286 = vunpack.c.l.b16 %v93
    %v287 = vunpack.c.h.b16 %v93
    %v288 = vunpack.c.l.b16 %v94
    %v289 = vunpack.c.l.b16 %v95
    %v290 = vunpack.c.h.b16 %v95
    %v291 = vunpack.c.l.b16 %v96
    %v292 = vunpack.c.h.b16 %v96
    %v293 = vunpack.c.l.b16 %v97
    %v294 = vunpack.c.h.b16 %v97
    %v295 = vunpack.c.l.b16 %v98
    %v296 = vunpack.c.h.b16 %v98
    %v297 = vunpack.c.l.b16 %v99
    %v298 = vunpack.c.l.b16 %v100
    %v299 = vunpack.c.h.b16 %v100
    %v300 = vunpack.c.l.b16 %v101
    %v301 = vunpack.c.h.b16 %v101
    %v302 = vunpack.c.l.b16 %v102
    %v303 = vunpack.c.h.b16 %v102
    %v304 = vunpack.c.l.b16 %v103
    %v305 = vunpack.c.h.b16 %v103
    %v306 = vunpack.c.l.b16 %v104
    %v307 = vunpack.c.l.b16 %v105
    %v308 = vunpack.c.h.b16 %v105
    %v309 = vunpack.c.l.b16 %v106
    %v310 = vunpack.c.h.b16 %v106
    %v311 = vunpack.c.l.b16 %v107
    %v312 = vunpack.c.h.b16 %v107
    %v313 = vunpack.c.l.b16 %v108
    %v314 = vunpack.c.h.b16 %v108
    %v315 = vunpack.c.l.b16 %v109
    %v316 = vunpack.c.l.b16 %v110
    %v317 = vunpack.c.h.b16 %v110
    %v318 = vunpack.c.l.b16 %v111
    %v319 = vunpack.c.h.b16 %v111
    %v320 = vunpack.c.l.b16 %v112
    %v321 = vunpack.c.h.b16 %v112
    %v322 = vunpack.c.l.b16 %v113
    %v323 = vunpack.c.h.b16 %v113
    %v324 = vunpack.c.l.b16 %v114
    %v325 = vunpack.c.l.b16 %v115
    %v326 = vunpack.c.h.b16 %v115
    %v327 = vunpack.c.l.b16 %v116
    %v328 = vunpack.c.h.b16 %v116
    %v329 = vunpack.c.l.b16 %v117
    %v330 = vunpack.c.h.b16 %v117
    %v331 = vunpack.c.l.b16 %v118
    %v332 = vunpack.c.h.b16 %v118
    %v333 = vunpack.c.l.b16 %v119
    %v334 = vunpack.c.l.b16 %v120
    %v335 = vunpack.c.h.b16 %v120
    %v336 = vunpack.c.l.b16 %v121
    %v337 = vunpack.c.h.b16 %v121
    %v338 = vunpack.c.l.b16 %v122
    %v339 = vunpack.c.h.b16 %v122
    %v340 = vunpack.c.l.b16 %v123
    %v341 = vunpack.c.h.b16 %v123
    %v342 = vunpack.c.l.b16 %v124
    %v343 = vunpack.c.l.b16 %v125
    %v344 = vunpack.c.h.b16 %v125
    %v345 = vunpack.c.l.b16 %v126
    %v346 = vunpack.c.h.b16 %v126
    %v347 = vunpack.c.l.b16 %v127
    %v348 = vunpack.c.h.b16 %v127
    %v349 = vunpack.c.l.b16 %v128
    %v350 = vunpack.c.h.b16 %v128
    %v351 = vunpack.c.l.b16 %v129
    %v352 = vunpack.c.l.b16 %v130
    %v353 = vunpack.c.h.b16 %v130
    %v354 = vunpack.c.l.b16 %v131
    %v355 = vunpack.c.h.b16 %v131
    %v356 = vunpack.c.l.b16 %v132
    %v357 = vunpack.c.h.b16 %v132
    %v358 = vunpack.c.l.b16 %v133
    %v359 = vunpack.c.h.b16 %v133
    %v360 = vunpack.c.l.b16 %v134
    %v361 = vunpack.c.l.b16 %v135
    %v362 = vunpack.c.h.b16 %v135
    %v363 = vunpack.c.l.b16 %v136
    %v364 = vunpack.c.h.b16 %v136
    %v365 = vunpack.c.l.b16 %v137
    %v366 = vunpack.c.h.b16 %v137
    %v367 = vunpack.c.l.b16 %v138
    %v368 = vunpack.c.h.b16 %v138
    %v369 = vunpack.c.l.b16 %v139
    %v370 = vunpack.c.l.b16 %v140
    %v371 = vunpack.c.h.b16 %v140
    %v372 = vunpack.c.l.b16 %v141
    %v373 = vunpack.c.h.b16 %v141
    %v374 = vunpack.c.l.b16 %v142
    %v375 = vunpack.c.h.b16 %v142
    %v376 = vunpack.c.l.b16 %v143
    %v377 = vunpack.c.h.b16 %v143
    %v378 = vunpack.c.l.b16 %v144
    %v379 = vunpack.c.l.b16 %v145
    %v380 = vunpack.c.h.b16 %v145
    %v381 = vunpack.c.l.b16 %v146
    %v382 = vunpack.c.h.b16 %v146
    %v383 = vunpack.c.l.b16 %v147
    %v384 = vunpack.c.h.b16 %v147
    %v385 = vunpack.c.l.b16 %v148
    %v386 = vunpack.c.h.b16 %v148
    %v387 = vunpack.c.l.b16 %v149
    %v388 = vunpack.c.l.b16 %v150
    %v389 = vunpack.c.h.b16 %v150
    %v390 = vunpack.c.l.b16 %v151
    %v391 = vunpack.c.h.b16 %v151
    %v392 = vunpack.c.l.b16 %v152
    %v393 = vunpack.c.h.b16 %v152
    %v394 = vunpack.c.l.b16 %v153
    %v395 = vunpack.c.h.b16 %v153
    %v396 = vunpack.c.l.b16 %v154
    %v397 = vunpack.c.l.b16 %v155
    %v398 = vunpack.c.h.b16 %v155
    %v399 = vunpack.c.l.b16 %v156
    %v400 = vunpack.c.h.b16 %v156
    %v401 = vunpack.c.l.b16 %v157
    %v402 = vunpack.c.h.b16 %v157
    %v403 = vunpack.c.l.b16 %v158
    %v404 = vunpack.c.h.b16 %v158
    %v405 = vunpack.c.l.b16 %v159
    %v406 = vpack.c.b16 %v271, %v262
    %v407 = vpack.c.b16 %v272, %v263
    %v408 = vpack.c.b16 %v273, %v264
    %v409 = vpack.c.b16 %v274, %v265
    %v410 = vpack.c.b16 %v275, %v266
    %v411 = vpack.c.b16 %v276, %v267
    %v412 = vpack.c.b16 %v277, %v268
    %v413 = vpack.c.b16 %v278, %v269
    %v414 = vpack.c.b16 %v279, %v270
    %v415 = vpack.c.b16 %v289, %v280
    %v416 = vpack.c.b16 %v290, %v281
    %v417 = vpack.c.b16 %v291, %v282
    %v418 = vpack.c.b16 %v292, %v283
    %v419 = vpack.c.b16 %v293, %v284
    %v420 = vpack.c.b16 %v294, %v285
    %v421 = vpack.c.b16 %v295, %v286
    %v422 = vpack.c.b16 %v296, %v287
    %v423 = vpack.c.b16 %v297, %v288
    %v424 = vpack.c.b16 %v307, %v298
    %v425 = vpack.c.b16 %v308, %v299
    %v426 = vpack.c.b16 %v309, %v300
    %v427 = vpack.c.b16 %v310, %v301
    %v428 = vpack.c.b16 %v311, %v302
    %v429 = vpack.c.b16 %v312, %v303
    %v430 = vpack.c.b16 %v313, %v304
    %v431 = vpack.c.b16 %v314, %v305
    %v432 = vpack.c.b16 %v315, %v306
    %v433 = vpack.c.b16 %v325, %v316
    %v434 = vpack.c.b16 %v326, %v317
    %v435 = vpack.c.b16 %v327, %v318
    %v436 = vpack.c.b16 %v328, %v319
    %v437 = vpack.c.b16 %v329, %v320
    %v438 = vpack.c.b16 %v330, %v321
    %v439 = vpack.c.b16 %v331, %v322
    %v440 = vpack.c.b16 %v332, %v323
    %v441 = vpack.c.b16 %v333, %v324
    %v442 = vpack.c.b16 %v343, %v334
    %v443 = vpack.c.b16 %v344, %v335
    %v444 = vpack.c.b16 %v345, %v336
    %v445 = vpack.c.b16 %v346, %v337
    %v446 = vpack.c.b16 %v347, %v338
    %v447 = vpack.c.b16 %v348, %v339
    %v448 = vpack.c.b16 %v349, %v340
    %v449 = vpack.c.b16 %v350, %v341
    %v450 = vpack.c.b16 %v351, %v342
    %v451 = vpack.c.b16 %v361, %v352
    %v452 = vpack.c.b16 %v362, %v353
    %v453 = vpack.c.b16 %v363, %v354
    %v454 = vpack.c.b16 %v364, %v355
    %v455 = vpack.c.b16 %v365, %v356
    %v456 = vpack.c.b16 %v366, %v357
    %v457 = vpack.c.b16 %v367, %v358
    %v458 = vpack.c.b16 %v368, %v359
    %v459 = vpack.c.b16 %v369, %v360
    %v460 = vpack.c.b16 %v379, %v370
    %v461 = vpack.c.b16 %v380, %v371
    %v462 = vpack.c.b16 %v381, %v372
    %v463 = vpack.c.b16 %v382, %v373
    %v464 = vpack.c.b16 %v383, %v374
    %v465 = vpack.c.b16 %v384, %v375
    %v466 = vpack.c.b16 %v385, %v376
    %v467 = vpack.c.b16 %v386, %v377
    %v468 = vpack.c.b16 %v387, %v378
    %v469 = vpack.c.b16 %v397, %v388
    %v470 = vpack.c.b16 %v398, %v389
    %v471 = vpack.c.b16 %v399, %v390
    %v472 = vpack.c.b16 %v400, %v391
    %v473 = vpack.c.b16 %v401, %v392
    %v474 = vpack.c.b16 %v402, %v393
    %v475 = vpack.c.b16 %v403, %v394
    %v476 = vpack.c.b16 %v404, %v395
    %v477 = vpack.c.b16 %v405, %v396
    %550 = vmatpush.bf16.msra.mxu0 %v469
    %551 = vmatpush.bf16.msra.mxu0 %v460
    %552 = vmatpush.bf16.msra.mxu0 %v451
    %553 = vmatpush.bf16.msra.mxu0 %v442
    %554 = vmatpush.bf16.msra.mxu0 %v433
    %555 = vmatpush.bf16.msra.mxu0 %v424
    %556 = vmatpush.bf16.msra.mxu0 %v415
    %557 = vmatpush.bf16.msra.mxu0 %v406
    %558 = vmatmul.bf16.gmra.mxu0 %v79
    %v559 = vpop.f32.mrf.mxu0
    %v560 = vadd.f32 %v164, %v559
    %v561 = vpop.f32.mrf.mxu0
    %562 = vdwg.mxu0
    %563 = vmatpush.bf16.msra.mxu0 %v470
    %564 = vmatpush.bf16.msra.mxu0 %v461
    %565 = vmatpush.bf16.msra.mxu0 %v452
    %566 = vmatpush.bf16.msra.mxu0 %v443
    %567 = vmatpush.bf16.msra.mxu0 %v434
    %568 = vmatpush.bf16.msra.mxu0 %v425
    %569 = vmatpush.bf16.msra.mxu0 %v416
    %570 = vmatpush.bf16.msra.mxu0 %v407
    %571 = vmatmul.bf16.gmra.mxu0 %v79
    %v572 = vpop.f32.mrf.mxu0
    %v573 = vadd.f32 %v165, %v572
    %v574 = vpop.f32.mrf.mxu0
    %575 = vdwg.mxu0
    %576 = vmatpush.bf16.msra.mxu0 %v471
    %577 = vmatpush.bf16.msra.mxu0 %v462
    %578 = vmatpush.bf16.msra.mxu0 %v453
    %579 = vmatpush.bf16.msra.mxu0 %v444
    %580 = vmatpush.bf16.msra.mxu0 %v435
    %581 = vmatpush.bf16.msra.mxu0 %v426
    %582 = vmatpush.bf16.msra.mxu0 %v417
    %583 = vmatpush.bf16.msra.mxu0 %v408
    %584 = vmatmul.bf16.gmra.mxu0 %v79
    %v585 = vpop.f32.mrf.mxu0
    %v586 = vadd.f32 %v166, %v585
    %v587 = vpop.f32.mrf.mxu0
    %588 = vdwg.mxu0
    %589 = vmatpush.bf16.msra.mxu0 %v472
    %590 = vmatpush.bf16.msra.mxu0 %v463
    %591 = vmatpush.bf16.msra.mxu0 %v454
    %592 = vmatpush.bf16.msra.mxu0 %v445
    %593 = vmatpush.bf16.msra.mxu0 %v436
    %594 = vmatpush.bf16.msra.mxu0 %v427
    %595 = vmatpush.bf16.msra.mxu0 %v418
    %596 = vmatpush.bf16.msra.mxu0 %v409
    %597 = vmatmul.bf16.gmra.mxu0 %v79
    %v598 = vpop.f32.mrf.mxu0
    %v599 = vadd.f32 %v167, %v598
    %v600 = vpop.f32.mrf.mxu0
    %601 = vdwg.mxu0
    %602 = vmatpush.bf16.msra.mxu0 %v473
    %603 = vmatpush.bf16.msra.mxu0 %v464
    %604 = vmatpush.bf16.msra.mxu0 %v455
    %605 = vmatpush.bf16.msra.mxu0 %v446
    %606 = vmatpush.bf16.msra.mxu0 %v437
    %607 = vmatpush.bf16.msra.mxu0 %v428
    %608 = vmatpush.bf16.msra.mxu0 %v419
    %609 = vmatpush.bf16.msra.mxu0 %v410
    %610 = vmatmul.bf16.gmra.mxu0 %v79
    %v611 = vpop.f32.mrf.mxu0
    %v612 = vadd.f32 %v168, %v611
    %v613 = vpop.f32.mrf.mxu0
    %614 = vdwg.mxu0
    %615 = vmatpush.bf16.msra.mxu0 %v474
    %616 = vmatpush.bf16.msra.mxu0 %v465
    %617 = vmatpush.bf16.msra.mxu0 %v456
    %618 = vmatpush.bf16.msra.mxu0 %v447
    %619 = vmatpush.bf16.msra.mxu0 %v438
    %620 = vmatpush.bf16.msra.mxu0 %v429
    %621 = vmatpush.bf16.msra.mxu0 %v420
    %622 = vmatpush.bf16.msra.mxu0 %v411
    %623 = vmatmul.bf16.gmra.mxu0 %v79
    %v624 = vpop.f32.mrf.mxu0
    %v625 = vadd.f32 %v169, %v624
    %v626 = vpop.f32.mrf.mxu0
    %627 = vdwg.mxu0
    %628 = vmatpush.bf16.msra.mxu0 %v475
    %629 = vmatpush.bf16.msra.mxu0 %v466
    %630 = vmatpush.bf16.msra.mxu0 %v457
    %631 = vmatpush.bf16.msra.mxu0 %v448
    %632 = vmatpush.bf16.msra.mxu0 %v439
    %633 = vmatpush.bf16.msra.mxu0 %v430
    %634 = vmatpush.bf16.msra.mxu0 %v421
    %635 = vmatpush.bf16.msra.mxu0 %v412
    %636 = vmatmul.bf16.gmra.mxu0 %v79
    %v637 = vpop.f32.mrf.mxu0
    %v638 = vadd.f32 %v170, %v637
    %v639 = vpop.f32.mrf.mxu0
    %640 = vdwg.mxu0
    %641 = vmatpush.bf16.msra.mxu0 %v476
    %642 = vmatpush.bf16.msra.mxu0 %v467
    %643 = vmatpush.bf16.msra.mxu0 %v458
    %644 = vmatpush.bf16.msra.mxu0 %v449
    %645 = vmatpush.bf16.msra.mxu0 %v440
    %646 = vmatpush.bf16.msra.mxu0 %v431
    %647 = vmatpush.bf16.msra.mxu0 %v422
    %648 = vmatpush.bf16.msra.mxu0 %v413
    %649 = vmatmul.bf16.gmra.mxu0 %v79
    %v650 = vpop.f32.mrf.mxu0
    %v651 = vadd.f32 %v171, %v650
    %v652 = vpop.f32.mrf.mxu0
    %653 = vdwg.mxu0
    %654 = vmatpush.bf16.msra.mxu0 %v477
    %655 = vmatpush.bf16.msra.mxu0 %v468
    %656 = vmatpush.bf16.msra.mxu0 %v459
    %657 = vmatpush.bf16.msra.mxu0 %v450
    %658 = vmatpush.bf16.msra.mxu0 %v441
    %659 = vmatpush.bf16.msra.mxu0 %v432
    %660 = vmatpush.bf16.msra.mxu0 %v423
    %661 = vmatpush.bf16.msra.mxu0 %v414
    %662 = vmatmul.bf16.gmra.mxu0 %v79
    %v663 = vpop.f32.mrf.mxu0
    %v664 = vadd.f32 %v172, %v663
    %v665 = vpop.f32.mrf.mxu0
    %666 = vdwg.mxu0
    %v675 = vrot.slane %v573, 6
    %v676 = vrot.slane %v586, 4
    %v677 = vrot.slane %v599, 2
    %v678 = vrot.slane %v625, 6
    %v679 = vrot.slane %v638, 4
    %v680 = vrot.slane %v651, 2
    %vm681 = vcmask 1041408
    %v682 = vsel %vm681, %v560, %v675
    %vm683 = vcmask 1045508
    %v684 = vsel %vm683, %v676, %v677
    %vm685 = vcmask 1043456
    %v686 = vsel %vm685, %v682, %v684
    %v687 = vsel %vm681, %v612, %v678
    %v688 = vsel %vm683, %v679, %v680
    %v689 = vsel %vm685, %v687, %v688
    %692 = vst [vmem:[#allocation8] sm:$0xff] %v686
    %693 = vst [vmem:[#allocation8 + $0x8] sm:$0xff] %v689
    %694 = vst [vmem:[#allocation8 + $0x10] sm:$0x3] %v664
    // Predicated region
    $region26: #{tpu_custom_call.1} parent=1 // pred_check
      _
    $region27: #{tpu_custom_call.1} parent=1 // pred_check_branch
      %696 = sbr.rel (0) target = $region29
    $region28: #{tpu_custom_call.1} parent=1 // pred_region
      %698 = vsyncadd [#allocation4], 0
      %s700 = sshll.u32 [#allocation8], 4
      %s701 = int_to_ptr.vmem [resolvable:$true] %s700
      %s702 = sshll.u32 %s3, 4
      %s703 = int_to_ptr.hbm [resolvable:$true] %s702
      %705 = dma.vmem_to_hbm [thread:$0]  %s701, 288, %s703, [#allocation4]
    $region29: #{tpu_custom_call.1} parent=1 // pred_fallthru
      _
    // Predicated region
    $region30: #{tpu_custom_call.1} parent=1 // pred_check
      _
    $region31: #{tpu_custom_call.1} parent=1 // pred_check_branch
      %707 = sbr.rel (0) target = $region33
    $region32: #{tpu_custom_call.1} parent=1 // pred_region
      %709 = dma.done [#allocation4], 288
    $region33: #{tpu_custom_call.1} parent=1 // pred_fallthru
      _
    %710 = vsyncpa [#allocation3], 1
    %711 = vsyncpa [#allocation6], 1
    %712 = vsyncpa [#allocation4], 1

</llo_original>
